<compile_context>
chip_gen: v6e
topology: v6e:2x2x1
jax: 0.10.0
libtpu: 0.0.40
codegen_flags: <defaults>
</compile_context>

<pallas_src>
import jax
import jax.numpy as jnp
from jax.experimental import pallas as pl
from jax.experimental.pallas import tpu as pltpu

_MAX_DMAS = 4  # DMAs in flight; enough to hide descriptor issue latency


def _cdiv(a, b):
    return -(-a // b)


def _plan_chunks(n, flat):
    """Static chunk plan (axis, [(start, size), ...]) over the (n, flat) view.

    Prefer splitting the leading axis (each chunk = contiguous rows).  When N
    is tiny, split the flat axis in 128-multiple slices (lane-dense, strided
    DMA).  Otherwise a single whole-array DMA.
    """
    if n >= _MAX_DMAS:
        base = _cdiv(n, _MAX_DMAS)
        return 0, [(s, min(base, n - s)) for s in range(0, n, base)]
    if flat % 128 == 0 and flat >= _MAX_DMAS * 128:
        base = _cdiv(_cdiv(flat, _MAX_DMAS), 128) * 128
        return 1, [(s, min(base, flat - s)) for s in range(0, flat, base)]
    return 0, [(0, n)]


def _make_flatten_dma_kernel(axis, chunks):
    """Build a kernel that copies the (n, flat) array HBM->HBM in len(chunks) DMAs."""

    def kernel(x_hbm, o_hbm, sem):
        copies = []
        for k, (start, size) in enumerate(chunks):
            if axis == 0:
                src = x_hbm.at[pl.ds(start, size)]
                dst = o_hbm.at[pl.ds(start, size)]
            else:
                src = x_hbm.at[:, pl.ds(start, size)]
                dst = o_hbm.at[:, pl.ds(start, size)]
            cp = pltpu.make_async_copy(src, dst, sem.at[k])
            cp.start()
            copies.append(cp)
        for cp in copies:  # all DMAs in flight; now drain
            cp.wait()

    return kernel


def flatten(x, *, donate=False):
    """Pallas equivalent of Flatten: (N, ...) -> (N, prod(rest)).

    donate=True aliases the output onto the input buffer (zero HBM traffic);
    the caller must not reuse `x` afterwards.
    """
    n = x.shape[0]
    flat = 1
    for d in x.shape[1:]:
        flat *= d

    # Metadata-only reshape in XLA; matches torch .view on contiguous input.
    x2 = x.reshape(n, flat)
    if n == 0 or flat == 0:
        return x2

    out_shape = jax.ShapeDtypeStruct((n, flat), x.dtype)
    hbm_spec = pl.BlockSpec(memory_space=pl.ANY)

    if donate:
        # Zero-copy: output aliases the input buffer; body only pins the
        # aliased output so the otherwise-empty kernel is kept.
        def alias_kernel(x_hbm, o_hbm):
            del x_hbm
            pltpu.touch(o_hbm)

        return pl.pallas_call(
            alias_kernel,
            out_shape=out_shape,
            in_specs=[hbm_spec],
            out_specs=hbm_spec,
            input_output_aliases={0: 0},
            compiler_params=pltpu.CompilerParams(has_side_effects=True),
        )(x2)

    axis, chunks = _plan_chunks(n, flat)
    kernel = _make_flatten_dma_kernel(axis, chunks)

    return pl.pallas_call(
        kernel,
        out_shape=out_shape,
        in_specs=[hbm_spec],
        out_specs=hbm_spec,
        scratch_shapes=[pltpu.SemaphoreType.DMA((len(chunks),))],
    )(x2)


if __name__ == "__main__":
    key = jax.random.PRNGKey(0)
    x = jax.random.normal(key, (2, 4, 16, 16), dtype=jnp.float32)

    out = flatten(x)
    jax.block_until_ready(out)

    # Reference: plain JAX reshape (same semantics as torch .view on contiguous).
    ref = x.reshape(x.shape[0], -1)
    assert out.shape == (2, 4 * 16 * 16), out.shape
    assert out.dtype == x.dtype
    assert jnp.array_equal(out, ref)

    print("KERNEL_OK")
</pallas_src>

<mosaic_0001>
module attributes {stable_mosaic.version = 11 : i64} {
  func.func @kernel(%arg0: memref<2x1024xf32, #tpu.memory_space<any>>, %arg1: memref<2x1024xf32, #tpu.memory_space<any>>, %arg2: memref<4x!tpu.dma_semaphore, #tpu.memory_space<semaphore_mem>>) attributes {dimension_semantics = [], scalar_prefetch = 0 : i64, scratch_operands = 1 : i64, tpu.core_type = #tpu.core_type<tc>} {
    %c0_i32 = arith.constant 0 : i32
    %c0_i32_0 = arith.constant 0 : i32
    %c0_i32_1 = arith.constant 0 : i32
    %0 = tpu.memref_slice %arg0[%c0_i32_0, %c0_i32_1] : memref<2x1024xf32, #tpu.memory_space<any>> -> memref<2x256xf32, #tpu.memory_space<any>>
    %c0_i32_2 = arith.constant 0 : i32
    %c0_i32_3 = arith.constant 0 : i32
    %1 = tpu.memref_slice %arg1[%c0_i32_2, %c0_i32_3] : memref<2x1024xf32, #tpu.memory_space<any>> -> memref<2x256xf32, #tpu.memory_space<any>>
    %2 = tpu.memref_slice %arg2[%c0_i32] : memref<4x!tpu.dma_semaphore, #tpu.memory_space<semaphore_mem>> -> memref<1x!tpu.dma_semaphore, #tpu.memory_space<semaphore_mem>>
    %3 = tpu.memref_squeeze %2 : memref<1x!tpu.dma_semaphore, #tpu.memory_space<semaphore_mem>> -> memref<!tpu.dma_semaphore, #tpu.memory_space<semaphore_mem>>
    tpu.enqueue_dma source(%0 : memref<2x256xf32, #tpu.memory_space<any>>) target(%1 : memref<2x256xf32, #tpu.memory_space<any>>) target_semaphore(%3 : memref<!tpu.dma_semaphore, #tpu.memory_space<semaphore_mem>>)
    %c1_i32 = arith.constant 1 : i32
    %c0_i32_4 = arith.constant 0 : i32
    %c256_i32 = arith.constant 256 : i32
    %4 = tpu.memref_slice %arg0[%c0_i32_4, %c256_i32] : memref<2x1024xf32, #tpu.memory_space<any>> -> memref<2x256xf32, #tpu.memory_space<any>>
    %c0_i32_5 = arith.constant 0 : i32
    %c256_i32_6 = arith.constant 256 : i32
    %5 = tpu.memref_slice %arg1[%c0_i32_5, %c256_i32_6] : memref<2x1024xf32, #tpu.memory_space<any>> -> memref<2x256xf32, #tpu.memory_space<any>>
    %6 = tpu.memref_slice %arg2[%c1_i32] : memref<4x!tpu.dma_semaphore, #tpu.memory_space<semaphore_mem>> -> memref<1x!tpu.dma_semaphore, #tpu.memory_space<semaphore_mem>>
    %7 = tpu.memref_squeeze %6 : memref<1x!tpu.dma_semaphore, #tpu.memory_space<semaphore_mem>> -> memref<!tpu.dma_semaphore, #tpu.memory_space<semaphore_mem>>
    tpu.enqueue_dma source(%4 : memref<2x256xf32, #tpu.memory_space<any>>) target(%5 : memref<2x256xf32, #tpu.memory_space<any>>) target_semaphore(%7 : memref<!tpu.dma_semaphore, #tpu.memory_space<semaphore_mem>>)
    %c2_i32 = arith.constant 2 : i32
    %c0_i32_7 = arith.constant 0 : i32
    %c512_i32 = arith.constant 512 : i32
    %8 = tpu.memref_slice %arg0[%c0_i32_7, %c512_i32] : memref<2x1024xf32, #tpu.memory_space<any>> -> memref<2x256xf32, #tpu.memory_space<any>>
    %c0_i32_8 = arith.constant 0 : i32
    %c512_i32_9 = arith.constant 512 : i32
    %9 = tpu.memref_slice %arg1[%c0_i32_8, %c512_i32_9] : memref<2x1024xf32, #tpu.memory_space<any>> -> memref<2x256xf32, #tpu.memory_space<any>>
    %10 = tpu.memref_slice %arg2[%c2_i32] : memref<4x!tpu.dma_semaphore, #tpu.memory_space<semaphore_mem>> -> memref<1x!tpu.dma_semaphore, #tpu.memory_space<semaphore_mem>>
    %11 = tpu.memref_squeeze %10 : memref<1x!tpu.dma_semaphore, #tpu.memory_space<semaphore_mem>> -> memref<!tpu.dma_semaphore, #tpu.memory_space<semaphore_mem>>
    tpu.enqueue_dma source(%8 : memref<2x256xf32, #tpu.memory_space<any>>) target(%9 : memref<2x256xf32, #tpu.memory_space<any>>) target_semaphore(%11 : memref<!tpu.dma_semaphore, #tpu.memory_space<semaphore_mem>>)
    %c3_i32 = arith.constant 3 : i32
    %c0_i32_10 = arith.constant 0 : i32
    %c768_i32 = arith.constant 768 : i32
    %12 = tpu.memref_slice %arg0[%c0_i32_10, %c768_i32] : memref<2x1024xf32, #tpu.memory_space<any>> -> memref<2x256xf32, #tpu.memory_space<any>>
    %c0_i32_11 = arith.constant 0 : i32
    %c768_i32_12 = arith.constant 768 : i32
    %13 = tpu.memref_slice %arg1[%c0_i32_11, %c768_i32_12] : memref<2x1024xf32, #tpu.memory_space<any>> -> memref<2x256xf32, #tpu.memory_space<any>>
    %14 = tpu.memref_slice %arg2[%c3_i32] : memref<4x!tpu.dma_semaphore, #tpu.memory_space<semaphore_mem>> -> memref<1x!tpu.dma_semaphore, #tpu.memory_space<semaphore_mem>>
    %15 = tpu.memref_squeeze %14 : memref<1x!tpu.dma_semaphore, #tpu.memory_space<semaphore_mem>> -> memref<!tpu.dma_semaphore, #tpu.memory_space<semaphore_mem>>
    tpu.enqueue_dma source(%12 : memref<2x256xf32, #tpu.memory_space<any>>) target(%13 : memref<2x256xf32, #tpu.memory_space<any>>) target_semaphore(%15 : memref<!tpu.dma_semaphore, #tpu.memory_space<semaphore_mem>>)
    %c0_i32_13 = arith.constant 0 : i32
    %c0_i32_14 = arith.constant 0 : i32
    %c0_i32_15 = arith.constant 0 : i32
    %16 = tpu.memref_slice %arg0[%c0_i32_14, %c0_i32_15] : memref<2x1024xf32, #tpu.memory_space<any>> -> memref<2x256xf32, #tpu.memory_space<any>>
    %c0_i32_16 = arith.constant 0 : i32
    %c0_i32_17 = arith.constant 0 : i32
    %17 = tpu.memref_slice %arg1[%c0_i32_16, %c0_i32_17] : memref<2x1024xf32, #tpu.memory_space<any>> -> memref<2x256xf32, #tpu.memory_space<any>>
    %18 = tpu.memref_slice %arg2[%c0_i32_13] : memref<4x!tpu.dma_semaphore, #tpu.memory_space<semaphore_mem>> -> memref<1x!tpu.dma_semaphore, #tpu.memory_space<semaphore_mem>>
    %19 = tpu.memref_squeeze %18 : memref<1x!tpu.dma_semaphore, #tpu.memory_space<semaphore_mem>> -> memref<!tpu.dma_semaphore, #tpu.memory_space<semaphore_mem>>
    tpu.wait_dma2 semaphore(%19 : memref<!tpu.dma_semaphore, #tpu.memory_space<semaphore_mem>>) src(%16 : memref<2x256xf32, #tpu.memory_space<any>>) dst(%17 : memref<2x256xf32, #tpu.memory_space<any>>)
    %c1_i32_18 = arith.constant 1 : i32
    %c0_i32_19 = arith.constant 0 : i32
    %c256_i32_20 = arith.constant 256 : i32
    %20 = tpu.memref_slice %arg0[%c0_i32_19, %c256_i32_20] : memref<2x1024xf32, #tpu.memory_space<any>> -> memref<2x256xf32, #tpu.memory_space<any>>
    %c0_i32_21 = arith.constant 0 : i32
    %c256_i32_22 = arith.constant 256 : i32
    %21 = tpu.memref_slice %arg1[%c0_i32_21, %c256_i32_22] : memref<2x1024xf32, #tpu.memory_space<any>> -> memref<2x256xf32, #tpu.memory_space<any>>
    %22 = tpu.memref_slice %arg2[%c1_i32_18] : memref<4x!tpu.dma_semaphore, #tpu.memory_space<semaphore_mem>> -> memref<1x!tpu.dma_semaphore, #tpu.memory_space<semaphore_mem>>
    %23 = tpu.memref_squeeze %22 : memref<1x!tpu.dma_semaphore, #tpu.memory_space<semaphore_mem>> -> memref<!tpu.dma_semaphore, #tpu.memory_space<semaphore_mem>>
    tpu.wait_dma2 semaphore(%23 : memref<!tpu.dma_semaphore, #tpu.memory_space<semaphore_mem>>) src(%20 : memref<2x256xf32, #tpu.memory_space<any>>) dst(%21 : memref<2x256xf32, #tpu.memory_space<any>>)
    %c2_i32_23 = arith.constant 2 : i32
    %c0_i32_24 = arith.constant 0 : i32
    %c512_i32_25 = arith.constant 512 : i32
    %24 = tpu.memref_slice %arg0[%c0_i32_24, %c512_i32_25] : memref<2x1024xf32, #tpu.memory_space<any>> -> memref<2x256xf32, #tpu.memory_space<any>>
    %c0_i32_26 = arith.constant 0 : i32
    %c512_i32_27 = arith.constant 512 : i32
    %25 = tpu.memref_slice %arg1[%c0_i32_26, %c512_i32_27] : memref<2x1024xf32, #tpu.memory_space<any>> -> memref<2x256xf32, #tpu.memory_space<any>>
    %26 = tpu.memref_slice %arg2[%c2_i32_23] : memref<4x!tpu.dma_semaphore, #tpu.memory_space<semaphore_mem>> -> memref<1x!tpu.dma_semaphore, #tpu.memory_space<semaphore_mem>>
    %27 = tpu.memref_squeeze %26 : memref<1x!tpu.dma_semaphore, #tpu.memory_space<semaphore_mem>> -> memref<!tpu.dma_semaphore, #tpu.memory_space<semaphore_mem>>
    tpu.wait_dma2 semaphore(%27 : memref<!tpu.dma_semaphore, #tpu.memory_space<semaphore_mem>>) src(%24 : memref<2x256xf32, #tpu.memory_space<any>>) dst(%25 : memref<2x256xf32, #tpu.memory_space<any>>)
    %c3_i32_28 = arith.constant 3 : i32
    %c0_i32_29 = arith.constant 0 : i32
    %c768_i32_30 = arith.constant 768 : i32
    %28 = tpu.memref_slice %arg0[%c0_i32_29, %c768_i32_30] : memref<2x1024xf32, #tpu.memory_space<any>> -> memref<2x256xf32, #tpu.memory_space<any>>
    %c0_i32_31 = arith.constant 0 : i32
    %c768_i32_32 = arith.constant 768 : i32
    %29 = tpu.memref_slice %arg1[%c0_i32_31, %c768_i32_32] : memref<2x1024xf32, #tpu.memory_space<any>> -> memref<2x256xf32, #tpu.memory_space<any>>
    %30 = tpu.memref_slice %arg2[%c3_i32_28] : memref<4x!tpu.dma_semaphore, #tpu.memory_space<semaphore_mem>> -> memref<1x!tpu.dma_semaphore, #tpu.memory_space<semaphore_mem>>
    %31 = tpu.memref_squeeze %30 : memref<1x!tpu.dma_semaphore, #tpu.memory_space<semaphore_mem>> -> memref<!tpu.dma_semaphore, #tpu.memory_space<semaphore_mem>>
    tpu.wait_dma2 semaphore(%31 : memref<!tpu.dma_semaphore, #tpu.memory_space<semaphore_mem>>) src(%28 : memref<2x256xf32, #tpu.memory_space<any>>) dst(%29 : memref<2x256xf32, #tpu.memory_space<any>>)
    return
  }
}

</mosaic_0001>

<llo_original>
// kernel: tpu_custom_call.1
$region0: #{tpu_custom_call.1}
  #allocation0 [shape = 'u32[]', space=smem, size = 0x4, offset = 0x4, fixed_abs, tag = 'smem constant byte address 0x4 - core index']
  #allocation1 [shape = 'u32[144,128]{1,0:T(1,128)}', space=vmem, size = 0x12000, scoped, tag = 'internal scratch']
  #allocation2 [shape = 's32[4]{0}', space=sflag, size = 0x10, scoped, tag = 'scratch operand']
  #allocation3 [shape = 's32[]', space=sflag, size = 0x4, offset = 0, fixed_abs, tag = 'sflag constant byte address 0x0 - dummy sync flag']
  #allocation4 [shape = 'u32[0]{0}', space=smem, size = 0, offset = 0, fixed_abs, tag = 'smem constant byte address 0x0 - null']
  #allocation5 [shape = 's32[]', space=sflag, size = 0x4, offset = 0, fixed_abs, tag = 'sflag constant byte address 0x0 - dummy sync flag']
  #allocation6 [shape = 'u32[0]{0}', space=smem, size = 0, offset = 0, fixed_abs, tag = 'smem constant byte address 0x0 - null']
  #allocation7 [shape = 's32[]', space=sflag, size = 0x4, offset = 0, fixed_abs, tag = 'sflag constant byte address 0x0 - dummy sync flag']
  #allocation8 [shape = 'u32[0]{0}', space=smem, size = 0, offset = 0, fixed_abs, tag = 'smem constant byte address 0x0 - null']
  #allocation9 [shape = 's32[]', space=sflag, size = 0x4, offset = 0, fixed_abs, tag = 'sflag constant byte address 0x0 - dummy sync flag']
  #allocation10 [shape = 'u32[0]{0}', space=smem, size = 0, offset = 0, fixed_abs, tag = 'smem constant byte address 0x0 - null']
  %s0 = inlined_call_operand.hbm [shape: f32[2,1024], index: 0, kind: input, shape index: {}]
  %s1 = inlined_call_operand.hbm [shape: f32[2,1024], index: 1, kind: output, shape index: {}]
  %s2 = sld [smem:[#allocation0]]
  $region2: #{tpu_custom_call.1} parent=0
    _
  %s4 = ssub.s32 1, %s2
  %s5 = scalar_select 0, %s4, %s2
  %s7 = sshll.u32 1, 14
  %s8 = sxor.u32 4294967295, %s7
  %12 = dma.general %s0, 64, %s1, [#allocation2], 131072, [#allocation4], 0, 0
  %s13 = scalar_lea.hbm %s0, 64
  %s14 = scalar_lea.hbm %s1, 64
  %s15 = scalar_lea.sflag [#allocation2], 1
  %s17 = sshll.u32 1, 14
  %s18 = sxor.u32 4294967295, %s17
  %22 = dma.general %s13, 64, %s14, %s15, 131072, [#allocation6], 0, 0
  %s23 = scalar_lea.hbm %s0, 128
  %s24 = scalar_lea.hbm %s1, 128
  %s25 = scalar_lea.sflag [#allocation2], 2
  %s27 = sshll.u32 1, 14
  %s28 = sxor.u32 4294967295, %s27
  %32 = dma.general %s23, 64, %s24, %s25, 131072, [#allocation8], 0, 0
  %s33 = scalar_lea.hbm %s0, 192
  %s34 = scalar_lea.hbm %s1, 192
  %s35 = scalar_lea.sflag [#allocation2], 3
  %s37 = sshll.u32 1, 14
  %s38 = sxor.u32 4294967295, %s37
  %42 = dma.general %s33, 64, %s34, %s35, 131072, [#allocation10], 0, 0
  %s43 = smul.u32 2, 1
  %s44 = smul.u32 %s43, 2
  %s45 = sshll.u32 %s44, 4
  %46 = dma.done [#allocation2], %s45
  %s47 = sshll.u32 %s44, 4
  %48 = dma.done %s15, %s47
  %s49 = sshll.u32 %s44, 4
  %50 = dma.done %s25, %s49
  %s51 = sshll.u32 %s44, 4
  %52 = dma.done %s35, %s51
  %53 = vsyncmov [#allocation2]
  %s54 = vpop.sfrf %53
  %p55 = scmp.eq.s32.totalorder %s54, 0
  %p56 = pneg %p55
  %58 = shalt.err (%p56)
  %s59 = scalar_lea.sflag [#allocation2], 1
  %60 = vsyncmov %s59
  %s61 = vpop.sfrf %60
  %p62 = scmp.eq.s32.totalorder %s61, 0
  %p63 = pneg %p62
  %65 = shalt.err (%p63)
  %s66 = scalar_lea.sflag [#allocation2], 2
  %67 = vsyncmov %s66
  %s68 = vpop.sfrf %67
  %p69 = scmp.eq.s32.totalorder %s68, 0
  %p70 = pneg %p69
  %72 = shalt.err (%p70)
  %s73 = scalar_lea.sflag [#allocation2], 3
  %74 = vsyncmov %s73
  %s75 = vpop.sfrf %74
  %p76 = scmp.eq.s32.totalorder %s75, 0
  %p77 = pneg %p76
  %79 = shalt.err (%p77)

</llo_original>
